<compile_context>
chip_gen: v5e
topology: v5e:2x2
jax: 0.10.0
libtpu: 0.0.40
codegen_flags: <defaults>
</compile_context>

<pallas_src>
import math
from functools import partial

import jax
import jax.numpy as jnp
from jax import lax
from jax.experimental import pallas as pl
from jax.experimental.pallas import tpu as pltpu


# ---- Pallas kernel: single invocation, whole problem in VMEM ------------------
def _mha_kernel(x_ref, wq_ref, bq_ref, wkv_ref, bkv_ref, wo_ref, bo_ref,
                bias_ref, o_ref, *, n_head, head_dim, dim_q):
    x = x_ref[...]                                   # (n_tok, D)

    # Fused K|V projection emitted transposed: (2D, D) x (n_tok, D) NT matmul
    # -> (2D, n_tok).  Per-head slices below are 8-row sublane-aligned views.
    kv_t = lax.dot_general(wkv_ref[...], x, (((1,), (1,)), ((), ())),
                           preferred_element_type=jnp.float32) + bkv_ref[...]

    wo = wo_ref[...]                                 # (D, D)  (in, out) layout
    bias = bias_ref[...]                             # (n_tok, n_tok) additive block mask

    acc = None
    for h in range(n_head):                          # tiny & static -> fully unrolled
        r0 = h * head_dim
        # Per-head Q projection; 1/sqrt(head_dim) already folded into wq/bq.
        q_h = (jnp.dot(x, wq_ref[h], preferred_element_type=jnp.float32)
               + bq_ref[h])                          # (n_tok, hd)
        k_t = kv_t[r0:r0 + head_dim, :]              # (hd, n_tok) aligned view
        v_t = kv_t[dim_q + r0:dim_q + r0 + head_dim, :]

        # Scores over all B*S tokens at once; cross-batch pairs are removed by
        # the precomputed additive -1e30 block mask (exp -> exactly 0).
        s = jnp.dot(q_h, k_t, preferred_element_type=jnp.float32) + bias   # (n_tok, n_tok)
        s = s - jnp.max(s, axis=-1, keepdims=True)
        p = jnp.exp(s)
        p = p * pl.reciprocal(jnp.sum(p, axis=-1, keepdims=True), approx=False)

        # P @ V with V kept transposed: NT matmul contracting the key axis.
        a_h = lax.dot_general(p, v_t, (((1,), (1,)), ((), ())),
                              preferred_element_type=jnp.float32)          # (n_tok, hd)

        # Fused head-merge + output projection (sublane-aligned Wo row slice).
        part = jnp.dot(a_h, wo[r0:r0 + head_dim, :],
                       preferred_element_type=jnp.float32)                 # (n_tok, D)
        acc = part if acc is None else acc + part

    o_ref[...] = acc + bo_ref[...]                   # single bias add, single store


# ---- wrapper -------------------------------------------------------------------
@partial(jax.jit, static_argnames=("n_head",))
def multihead_attention(x, wq_heads, bq_heads, wkv_t, bkv_t, wo, bo, attn_bias,
                        *, n_head):
    """x: (B, S, D) float32; params from prepare_params(). Returns (B, S, D)."""
    batch, seq, dim_q = x.shape
    head_dim = dim_q // n_head
    n_tok = batch * seq

    kernel = partial(_mha_kernel, n_head=n_head, head_dim=head_dim, dim_q=dim_q)
    vmem = lambda: pl.BlockSpec(memory_space=pltpu.MemorySpace.VMEM)
    out = pl.pallas_call(
        kernel,
        out_shape=jax.ShapeDtypeStruct((n_tok, dim_q), jnp.float32),
        in_specs=[vmem() for _ in range(8)],
        out_specs=vmem(),
    )(x.reshape(n_tok, dim_q), wq_heads, bq_heads, wkv_t, bkv_t, wo, bo, attn_bias)
    return out.reshape(batch, seq, dim_q)


# ---- one-time parameter preprocessing (kept off the per-call path) -------------
def prepare_params(wq, bq, wk, bk, wv, bv, wo, bo, n_head):
    """Weights stored (in, out) so the kernel does x @ W directly.

    Returns:
      wq_heads (H, D, hd)  per-head Q weights, 1/sqrt(hd) folded in
      bq_heads (H, 1, hd)  per-head Q bias,    1/sqrt(hd) folded in
      wkv_t    (2D, D)     [Wk^T ; Wv^T] for the transposed K|V projection
      bkv_t    (2D, 1)     [bk^T ; bv^T]
      wo, bo               unchanged
    """
    dim_q = wq.shape[0]
    head_dim = dim_q // n_head
    scale = 1.0 / math.sqrt(head_dim)
    wq_heads = (wq * scale).reshape(dim_q, n_head, head_dim).transpose(1, 0, 2)
    bq_heads = (bq * scale).reshape(1, n_head, head_dim).transpose(1, 0, 2)
    wkv_t = jnp.concatenate([wk.T, wv.T], axis=0)
    bkv_t = jnp.concatenate([bk.T, bv.T], axis=0)
    return wq_heads, bq_heads, wkv_t, bkv_t, wo, bo


def make_attn_bias(batch, seq):
    """Additive mask (0 within a batch block, -1e30 across batches), built once
    so the kernel needs no iota/compare/select -- just one VALU add."""
    n_tok = batch * seq
    ids = jnp.arange(n_tok, dtype=jnp.int32) // seq
    return jnp.where(ids[:, None] == ids[None, :], 0.0, -1e30).astype(jnp.float32)


# ---- pure-JAX reference (mirrors the PyTorch module math) ----------------------
def reference(x, wq, bq, wk, bk, wv, bv, wo, bo, n_head):
    batch, seq, dim_q = x.shape
    head_dim = dim_q // n_head
    qp = x @ wq + bq
    kp = x @ wk + bk
    vp = x @ wv + bv

    def split(t):  # (B, S, D) -> (B, H, S, hd)
        return t.reshape(batch, seq, n_head, head_dim).transpose(0, 2, 1, 3)

    qh, kh, vh = split(qp), split(kp), split(vp)
    attn = jnp.einsum("bhqd,bhkd->bhqk", qh, kh) / math.sqrt(head_dim)
    attn = jax.nn.softmax(attn, axis=-1)
    a = jnp.einsum("bhqk,bhkd->bhqd", attn, vh)
    a = a.transpose(0, 2, 1, 3).reshape(batch, seq, dim_q)
    return a @ wo + bo


if __name__ == "__main__":
    B, S, DIM_Q, N_HEAD = 2, 8, 32, 4

    key = jax.random.PRNGKey(0)
    keys = jax.random.split(key, 9)

    # Deterministic synthetic parameters. nn.Linear weights are (out, in); we
    # store the transpose (in, out) so projections are x @ W.
    bound = 1.0 / math.sqrt(DIM_Q)
    x  = jax.random.normal(keys[0], (B, S, DIM_Q), jnp.float32)
    wq = jax.random.uniform(keys[1], (DIM_Q, DIM_Q), jnp.float32, -bound, bound)
    bq = jax.random.uniform(keys[2], (1, DIM_Q), jnp.float32, -bound, bound)
    wk = jax.random.uniform(keys[3], (DIM_Q, DIM_Q), jnp.float32, -bound, bound)
    bk = jax.random.uniform(keys[4], (1, DIM_Q), jnp.float32, -bound, bound)
    wv = jax.random.uniform(keys[5], (DIM_Q, DIM_Q), jnp.float32, -bound, bound)
    bv = jax.random.uniform(keys[6], (1, DIM_Q), jnp.float32, -bound, bound)
    wo = jax.random.uniform(keys[7], (DIM_Q, DIM_Q), jnp.float32, -bound, bound)
    bo = jax.random.uniform(keys[8], (1, DIM_Q), jnp.float32, -bound, bound)

    # One-time parameter prep (analogous to folding into module parameters).
    params = prepare_params(wq, bq, wk, bk, wv, bv, wo, bo, N_HEAD)
    attn_bias = make_attn_bias(B, S)
    jax.block_until_ready(params)
    jax.block_until_ready(attn_bias)

    out = multihead_attention(x, *params, attn_bias, n_head=N_HEAD)
    jax.block_until_ready(out)

    ref = reference(x, wq, bq, wk, bk, wv, bv, wo, bo, N_HEAD)
    assert out.shape == (B, S, DIM_Q)
    err = jnp.max(jnp.abs(out - ref))
    assert jnp.allclose(out, ref, atol=1e-5, rtol=1e-5), f"max abs err {err}"

    print("KERNEL_OK")
</pallas_src>

<mosaic_0001>
module attributes {stable_mosaic.version = 11 : i64} {
  func.func @_mha_kernel(%arg0: memref<16x32xf32, #tpu.memory_space<vmem>>, %arg1: memref<4x32x8xf32, #tpu.memory_space<vmem>>, %arg2: memref<4x1x8xf32, #tpu.memory_space<vmem>>, %arg3: memref<64x32xf32, #tpu.memory_space<vmem>>, %arg4: memref<64x1xf32, #tpu.memory_space<vmem>>, %arg5: memref<32x32xf32, #tpu.memory_space<vmem>>, %arg6: memref<1x32xf32, #tpu.memory_space<vmem>>, %arg7: memref<16x16xf32, #tpu.memory_space<vmem>>, %arg8: memref<16x32xf32, #tpu.memory_space<vmem>>) attributes {dimension_semantics = [], scalar_prefetch = 0 : i64, scratch_operands = 0 : i64, tpu.core_type = #tpu.core_type<tc>} {
    %c0 = arith.constant 0 : index
    %c0_0 = arith.constant 0 : index
    %0 = vector.load %arg0[%c0, %c0_0] : memref<16x32xf32, #tpu.memory_space<vmem>>, vector<16x32xf32>
    %c0_1 = arith.constant 0 : index
    %c0_2 = arith.constant 0 : index
    %1 = vector.load %arg3[%c0_1, %c0_2] : memref<64x32xf32, #tpu.memory_space<vmem>>, vector<64x32xf32>
    %cst = arith.constant dense<0.000000e+00> : vector<64x16xf32>
    %2 = tpu.matmul %1, %0, %cst {dimension_numbers = #tpu.dot_dimension_numbers<[1], [1], [0], [0], [0, 0, 1, 0], [], []>} : vector<64x32xf32>, vector<16x32xf32>, vector<64x16xf32> -> vector<64x16xf32>
    %c0_3 = arith.constant 0 : index
    %c0_4 = arith.constant 0 : index
    %3 = vector.load %arg4[%c0_3, %c0_4] : memref<64x1xf32, #tpu.memory_space<vmem>>, vector<64x1xf32>
    %4 = vector.broadcast %3 : vector<64x1xf32> to vector<64x16xf32>
    %5 = arith.addf %2, %4 : vector<64x16xf32>
    %c0_5 = arith.constant 0 : index
    %c0_6 = arith.constant 0 : index
    %6 = vector.load %arg5[%c0_5, %c0_6] : memref<32x32xf32, #tpu.memory_space<vmem>>, vector<32x32xf32>
    %c0_7 = arith.constant 0 : index
    %c0_8 = arith.constant 0 : index
    %7 = vector.load %arg7[%c0_7, %c0_8] : memref<16x16xf32, #tpu.memory_space<vmem>>, vector<16x16xf32>
    %c0_9 = arith.constant 0 : index
    %c0_10 = arith.constant 0 : index
    %c0_11 = arith.constant 0 : index
    %8 = vector.load %arg1[%c0_9, %c0_10, %c0_11] : memref<4x32x8xf32, #tpu.memory_space<vmem>>, vector<1x32x8xf32>
    %9 = vector.shape_cast %8 : vector<1x32x8xf32> to vector<32x8xf32>
    %cst_12 = arith.constant dense<0.000000e+00> : vector<16x8xf32>
    %10 = tpu.matmul %0, %9, %cst_12 {dimension_numbers = #tpu.dot_dimension_numbers<[1], [0], [0], [1], [0, 0, 1, 1], [], []>} : vector<16x32xf32>, vector<32x8xf32>, vector<16x8xf32> -> vector<16x8xf32>
    %c0_13 = arith.constant 0 : index
    %c0_14 = arith.constant 0 : index
    %c0_15 = arith.constant 0 : index
    %11 = vector.load %arg2[%c0_13, %c0_14, %c0_15] : memref<4x1x8xf32, #tpu.memory_space<vmem>>, vector<1x1x8xf32>
    %12 = vector.shape_cast %11 : vector<1x1x8xf32> to vector<1x8xf32>
    %13 = vector.broadcast %12 : vector<1x8xf32> to vector<16x8xf32>
    %14 = arith.addf %10, %13 : vector<16x8xf32>
    %15 = vector.extract_strided_slice %5 {offsets = [0, 0], sizes = [8, 16], strides = [1, 1]} : vector<64x16xf32> to vector<8x16xf32>
    %16 = vector.extract_strided_slice %5 {offsets = [32, 0], sizes = [8, 16], strides = [1, 1]} : vector<64x16xf32> to vector<8x16xf32>
    %cst_16 = arith.constant dense<0.000000e+00> : vector<16x16xf32>
    %17 = tpu.matmul %14, %15, %cst_16 {dimension_numbers = #tpu.dot_dimension_numbers<[1], [0], [0], [1], [0, 0, 1, 1], [], []>} : vector<16x8xf32>, vector<8x16xf32>, vector<16x16xf32> -> vector<16x16xf32>
    %18 = arith.addf %17, %7 : vector<16x16xf32>
    %cst_17 = arith.constant dense<0xFF800000> : vector<16xf32>
    %19 = vector.multi_reduction <maximumf>, %18, %cst_17 [1] : vector<16x16xf32> to vector<16xf32>
    %20 = vector.shape_cast %19 : vector<16xf32> to vector<16x1xf32>
    %21 = vector.broadcast %20 : vector<16x1xf32> to vector<16x16xf32>
    %22 = arith.subf %18, %21 : vector<16x16xf32>
    %23 = math.exp %22 : vector<16x16xf32>
    %cst_18 = arith.constant dense<0.000000e+00> : vector<16xf32>
    %24 = vector.multi_reduction <add>, %23, %cst_18 [1] : vector<16x16xf32> to vector<16xf32>
    %25 = vector.shape_cast %24 : vector<16xf32> to vector<16x1xf32>
    %26 = tpu.reciprocal %25 : vector<16x1xf32> -> vector<16x1xf32>
    %27 = vector.broadcast %26 : vector<16x1xf32> to vector<16x16xf32>
    %28 = arith.mulf %23, %27 : vector<16x16xf32>
    %cst_19 = arith.constant dense<0.000000e+00> : vector<16x8xf32>
    %29 = tpu.matmul %28, %16, %cst_19 {dimension_numbers = #tpu.dot_dimension_numbers<[1], [1], [0], [0], [0, 0, 1, 0], [], []>} : vector<16x16xf32>, vector<8x16xf32>, vector<16x8xf32> -> vector<16x8xf32>
    %30 = vector.extract_strided_slice %6 {offsets = [0, 0], sizes = [8, 32], strides = [1, 1]} : vector<32x32xf32> to vector<8x32xf32>
    %cst_20 = arith.constant dense<0.000000e+00> : vector<16x32xf32>
    %31 = tpu.matmul %29, %30, %cst_20 {dimension_numbers = #tpu.dot_dimension_numbers<[1], [0], [0], [1], [0, 0, 1, 1], [], []>} : vector<16x8xf32>, vector<8x32xf32>, vector<16x32xf32> -> vector<16x32xf32>
    %c1 = arith.constant 1 : index
    %c0_21 = arith.constant 0 : index
    %c0_22 = arith.constant 0 : index
    %32 = vector.load %arg1[%c1, %c0_21, %c0_22] : memref<4x32x8xf32, #tpu.memory_space<vmem>>, vector<1x32x8xf32>
    %33 = vector.shape_cast %32 : vector<1x32x8xf32> to vector<32x8xf32>
    %cst_23 = arith.constant dense<0.000000e+00> : vector<16x8xf32>
    %34 = tpu.matmul %0, %33, %cst_23 {dimension_numbers = #tpu.dot_dimension_numbers<[1], [0], [0], [1], [0, 0, 1, 1], [], []>} : vector<16x32xf32>, vector<32x8xf32>, vector<16x8xf32> -> vector<16x8xf32>
    %c1_24 = arith.constant 1 : index
    %c0_25 = arith.constant 0 : index
    %c0_26 = arith.constant 0 : index
    %35 = vector.load %arg2[%c1_24, %c0_25, %c0_26] : memref<4x1x8xf32, #tpu.memory_space<vmem>>, vector<1x1x8xf32>
    %36 = vector.shape_cast %35 : vector<1x1x8xf32> to vector<1x8xf32>
    %37 = vector.broadcast %36 : vector<1x8xf32> to vector<16x8xf32>
    %38 = arith.addf %34, %37 : vector<16x8xf32>
    %39 = vector.extract_strided_slice %5 {offsets = [8, 0], sizes = [8, 16], strides = [1, 1]} : vector<64x16xf32> to vector<8x16xf32>
    %40 = vector.extract_strided_slice %5 {offsets = [40, 0], sizes = [8, 16], strides = [1, 1]} : vector<64x16xf32> to vector<8x16xf32>
    %cst_27 = arith.constant dense<0.000000e+00> : vector<16x16xf32>
    %41 = tpu.matmul %38, %39, %cst_27 {dimension_numbers = #tpu.dot_dimension_numbers<[1], [0], [0], [1], [0, 0, 1, 1], [], []>} : vector<16x8xf32>, vector<8x16xf32>, vector<16x16xf32> -> vector<16x16xf32>
    %42 = arith.addf %41, %7 : vector<16x16xf32>
    %cst_28 = arith.constant dense<0xFF800000> : vector<16xf32>
    %43 = vector.multi_reduction <maximumf>, %42, %cst_28 [1] : vector<16x16xf32> to vector<16xf32>
    %44 = vector.shape_cast %43 : vector<16xf32> to vector<16x1xf32>
    %45 = vector.broadcast %44 : vector<16x1xf32> to vector<16x16xf32>
    %46 = arith.subf %42, %45 : vector<16x16xf32>
    %47 = math.exp %46 : vector<16x16xf32>
    %cst_29 = arith.constant dense<0.000000e+00> : vector<16xf32>
    %48 = vector.multi_reduction <add>, %47, %cst_29 [1] : vector<16x16xf32> to vector<16xf32>
    %49 = vector.shape_cast %48 : vector<16xf32> to vector<16x1xf32>
    %50 = tpu.reciprocal %49 : vector<16x1xf32> -> vector<16x1xf32>
    %51 = vector.broadcast %50 : vector<16x1xf32> to vector<16x16xf32>
    %52 = arith.mulf %47, %51 : vector<16x16xf32>
    %cst_30 = arith.constant dense<0.000000e+00> : vector<16x8xf32>
    %53 = tpu.matmul %52, %40, %cst_30 {dimension_numbers = #tpu.dot_dimension_numbers<[1], [1], [0], [0], [0, 0, 1, 0], [], []>} : vector<16x16xf32>, vector<8x16xf32>, vector<16x8xf32> -> vector<16x8xf32>
    %54 = vector.extract_strided_slice %6 {offsets = [8, 0], sizes = [8, 32], strides = [1, 1]} : vector<32x32xf32> to vector<8x32xf32>
    %cst_31 = arith.constant dense<0.000000e+00> : vector<16x32xf32>
    %55 = tpu.matmul %53, %54, %cst_31 {dimension_numbers = #tpu.dot_dimension_numbers<[1], [0], [0], [1], [0, 0, 1, 1], [], []>} : vector<16x8xf32>, vector<8x32xf32>, vector<16x32xf32> -> vector<16x32xf32>
    %56 = arith.addf %31, %55 : vector<16x32xf32>
    %c2 = arith.constant 2 : index
    %c0_32 = arith.constant 0 : index
    %c0_33 = arith.constant 0 : index
    %57 = vector.load %arg1[%c2, %c0_32, %c0_33] : memref<4x32x8xf32, #tpu.memory_space<vmem>>, vector<1x32x8xf32>
    %58 = vector.shape_cast %57 : vector<1x32x8xf32> to vector<32x8xf32>
    %cst_34 = arith.constant dense<0.000000e+00> : vector<16x8xf32>
    %59 = tpu.matmul %0, %58, %cst_34 {dimension_numbers = #tpu.dot_dimension_numbers<[1], [0], [0], [1], [0, 0, 1, 1], [], []>} : vector<16x32xf32>, vector<32x8xf32>, vector<16x8xf32> -> vector<16x8xf32>
    %c2_35 = arith.constant 2 : index
    %c0_36 = arith.constant 0 : index
    %c0_37 = arith.constant 0 : index
    %60 = vector.load %arg2[%c2_35, %c0_36, %c0_37] : memref<4x1x8xf32, #tpu.memory_space<vmem>>, vector<1x1x8xf32>
    %61 = vector.shape_cast %60 : vector<1x1x8xf32> to vector<1x8xf32>
    %62 = vector.broadcast %61 : vector<1x8xf32> to vector<16x8xf32>
    %63 = arith.addf %59, %62 : vector<16x8xf32>
    %64 = vector.extract_strided_slice %5 {offsets = [16, 0], sizes = [8, 16], strides = [1, 1]} : vector<64x16xf32> to vector<8x16xf32>
    %65 = vector.extract_strided_slice %5 {offsets = [48, 0], sizes = [8, 16], strides = [1, 1]} : vector<64x16xf32> to vector<8x16xf32>
    %cst_38 = arith.constant dense<0.000000e+00> : vector<16x16xf32>
    %66 = tpu.matmul %63, %64, %cst_38 {dimension_numbers = #tpu.dot_dimension_numbers<[1], [0], [0], [1], [0, 0, 1, 1], [], []>} : vector<16x8xf32>, vector<8x16xf32>, vector<16x16xf32> -> vector<16x16xf32>
    %67 = arith.addf %66, %7 : vector<16x16xf32>
    %cst_39 = arith.constant dense<0xFF800000> : vector<16xf32>
    %68 = vector.multi_reduction <maximumf>, %67, %cst_39 [1] : vector<16x16xf32> to vector<16xf32>
    %69 = vector.shape_cast %68 : vector<16xf32> to vector<16x1xf32>
    %70 = vector.broadcast %69 : vector<16x1xf32> to vector<16x16xf32>
    %71 = arith.subf %67, %70 : vector<16x16xf32>
    %72 = math.exp %71 : vector<16x16xf32>
    %cst_40 = arith.constant dense<0.000000e+00> : vector<16xf32>
    %73 = vector.multi_reduction <add>, %72, %cst_40 [1] : vector<16x16xf32> to vector<16xf32>
    %74 = vector.shape_cast %73 : vector<16xf32> to vector<16x1xf32>
    %75 = tpu.reciprocal %74 : vector<16x1xf32> -> vector<16x1xf32>
    %76 = vector.broadcast %75 : vector<16x1xf32> to vector<16x16xf32>
    %77 = arith.mulf %72, %76 : vector<16x16xf32>
    %cst_41 = arith.constant dense<0.000000e+00> : vector<16x8xf32>
    %78 = tpu.matmul %77, %65, %cst_41 {dimension_numbers = #tpu.dot_dimension_numbers<[1], [1], [0], [0], [0, 0, 1, 0], [], []>} : vector<16x16xf32>, vector<8x16xf32>, vector<16x8xf32> -> vector<16x8xf32>
    %79 = vector.extract_strided_slice %6 {offsets = [16, 0], sizes = [8, 32], strides = [1, 1]} : vector<32x32xf32> to vector<8x32xf32>
    %cst_42 = arith.constant dense<0.000000e+00> : vector<16x32xf32>
    %80 = tpu.matmul %78, %79, %cst_42 {dimension_numbers = #tpu.dot_dimension_numbers<[1], [0], [0], [1], [0, 0, 1, 1], [], []>} : vector<16x8xf32>, vector<8x32xf32>, vector<16x32xf32> -> vector<16x32xf32>
    %81 = arith.addf %56, %80 : vector<16x32xf32>
    %c3 = arith.constant 3 : index
    %c0_43 = arith.constant 0 : index
    %c0_44 = arith.constant 0 : index
    %82 = vector.load %arg1[%c3, %c0_43, %c0_44] : memref<4x32x8xf32, #tpu.memory_space<vmem>>, vector<1x32x8xf32>
    %83 = vector.shape_cast %82 : vector<1x32x8xf32> to vector<32x8xf32>
    %cst_45 = arith.constant dense<0.000000e+00> : vector<16x8xf32>
    %84 = tpu.matmul %0, %83, %cst_45 {dimension_numbers = #tpu.dot_dimension_numbers<[1], [0], [0], [1], [0, 0, 1, 1], [], []>} : vector<16x32xf32>, vector<32x8xf32>, vector<16x8xf32> -> vector<16x8xf32>
    %c3_46 = arith.constant 3 : index
    %c0_47 = arith.constant 0 : index
    %c0_48 = arith.constant 0 : index
    %85 = vector.load %arg2[%c3_46, %c0_47, %c0_48] : memref<4x1x8xf32, #tpu.memory_space<vmem>>, vector<1x1x8xf32>
    %86 = vector.shape_cast %85 : vector<1x1x8xf32> to vector<1x8xf32>
    %87 = vector.broadcast %86 : vector<1x8xf32> to vector<16x8xf32>
    %88 = arith.addf %84, %87 : vector<16x8xf32>
    %89 = vector.extract_strided_slice %5 {offsets = [24, 0], sizes = [8, 16], strides = [1, 1]} : vector<64x16xf32> to vector<8x16xf32>
    %90 = vector.extract_strided_slice %5 {offsets = [56, 0], sizes = [8, 16], strides = [1, 1]} : vector<64x16xf32> to vector<8x16xf32>
    %cst_49 = arith.constant dense<0.000000e+00> : vector<16x16xf32>
    %91 = tpu.matmul %88, %89, %cst_49 {dimension_numbers = #tpu.dot_dimension_numbers<[1], [0], [0], [1], [0, 0, 1, 1], [], []>} : vector<16x8xf32>, vector<8x16xf32>, vector<16x16xf32> -> vector<16x16xf32>
    %92 = arith.addf %91, %7 : vector<16x16xf32>
    %cst_50 = arith.constant dense<0xFF800000> : vector<16xf32>
    %93 = vector.multi_reduction <maximumf>, %92, %cst_50 [1] : vector<16x16xf32> to vector<16xf32>
    %94 = vector.shape_cast %93 : vector<16xf32> to vector<16x1xf32>
    %95 = vector.broadcast %94 : vector<16x1xf32> to vector<16x16xf32>
    %96 = arith.subf %92, %95 : vector<16x16xf32>
    %97 = math.exp %96 : vector<16x16xf32>
    %cst_51 = arith.constant dense<0.000000e+00> : vector<16xf32>
    %98 = vector.multi_reduction <add>, %97, %cst_51 [1] : vector<16x16xf32> to vector<16xf32>
    %99 = vector.shape_cast %98 : vector<16xf32> to vector<16x1xf32>
    %100 = tpu.reciprocal %99 : vector<16x1xf32> -> vector<16x1xf32>
    %101 = vector.broadcast %100 : vector<16x1xf32> to vector<16x16xf32>
    %102 = arith.mulf %97, %101 : vector<16x16xf32>
    %cst_52 = arith.constant dense<0.000000e+00> : vector<16x8xf32>
    %103 = tpu.matmul %102, %90, %cst_52 {dimension_numbers = #tpu.dot_dimension_numbers<[1], [1], [0], [0], [0, 0, 1, 0], [], []>} : vector<16x16xf32>, vector<8x16xf32>, vector<16x8xf32> -> vector<16x8xf32>
    %104 = vector.extract_strided_slice %6 {offsets = [24, 0], sizes = [8, 32], strides = [1, 1]} : vector<32x32xf32> to vector<8x32xf32>
    %cst_53 = arith.constant dense<0.000000e+00> : vector<16x32xf32>
    %105 = tpu.matmul %103, %104, %cst_53 {dimension_numbers = #tpu.dot_dimension_numbers<[1], [0], [0], [1], [0, 0, 1, 1], [], []>} : vector<16x8xf32>, vector<8x32xf32>, vector<16x32xf32> -> vector<16x32xf32>
    %106 = arith.addf %81, %105 : vector<16x32xf32>
    %c0_54 = arith.constant 0 : index
    %c0_55 = arith.constant 0 : index
    %107 = vector.load %arg6[%c0_54, %c0_55] : memref<1x32xf32, #tpu.memory_space<vmem>>, vector<1x32xf32>
    %108 = vector.broadcast %107 : vector<1x32xf32> to vector<16x32xf32>
    %109 = arith.addf %106, %108 : vector<16x32xf32>
    %c0_56 = arith.constant 0 : index
    %c0_57 = arith.constant 0 : index
    %110 = vector.load %arg8[%c0_56, %c0_57] : memref<16x32xf32, #tpu.memory_space<vmem>>, vector<16x32xf32>
    tpu.vector_store %arg8[%c0_56, %c0_57], %109 {strides = array<i32>} : memref<16x32xf32, #tpu.memory_space<vmem>>, vector<16x32xf32>,
    return
  }
}

</mosaic_0001>

<llo_original>
// kernel: multihead_attention.1
$region0: #{multihead_attention.1}
  #allocation0 [shape = 'u32[]', space=smem, size = 0x4, offset = 0x4, fixed_abs, tag = 'smem constant byte address 0x4 - core index']
  #allocation1 [shape = 'u32[72,128]{1,0:T(1,128)}', space=vmem, size = 0x9000, scoped, tag = 'internal scratch']
  %s0 = inlined_call_operand.vmem [shape: f32[16,32], index: 0, kind: input, shape index: {}]
  %s1 = inlined_call_operand.vmem [shape: f32[4,32,8], index: 1, kind: input, shape index: {}]
  %s2 = inlined_call_operand.vmem [shape: f32[4,1,8], index: 2, kind: input, shape index: {}]
  %s3 = inlined_call_operand.vmem [shape: f32[64,32], index: 3, kind: input, shape index: {}]
  %s4 = inlined_call_operand.vmem [shape: f32[64,1], index: 4, kind: input, shape index: {}]
  %s5 = inlined_call_operand.vmem [shape: f32[32,32], index: 5, kind: input, shape index: {}]
  %s6 = inlined_call_operand.vmem [shape: f32[1,32], index: 6, kind: input, shape index: {}]
  %s7 = inlined_call_operand.vmem [shape: f32[16,16], index: 7, kind: input, shape index: {}]
  %s8 = inlined_call_operand.hbm [shape: f32[16,32], index: 8, kind: output, shape index: {}]
  %s9 = sld [smem:[#allocation0]]
  $region42: #{multihead_attention.1} parent=0
    _
  %s11 = ssub.s32 1, %s9
  %s12 = scalar_select 0, %s11, %s9
  $region1: #{multihead_attention.1} parent=0
    #allocation2 [shape = 'u8[8192]{0}', space=vmem, size = 0x2000, scoped, tag = 'output window, operand 0, single buffered']
    #allocation3 [shape = 's32[1]{0}', space=sflag, size = 0x4, scoped, tag = 'scoped memory for multihead_attention.1']
    %13 = vsyncpa [#allocation3], 0
    // Predicated region
    $region2: #{multihead_attention.1} parent=1 // pred_check
      _
    $region3: #{multihead_attention.1} parent=1 // pred_check_branch
      %15 = sbr.rel (0) target = $region5
    $region4: #{multihead_attention.1} parent=1 // pred_region
      _
    $region5: #{multihead_attention.1} parent=1 // pred_fallthru
      _
    // Predicated region
    $region6: #{multihead_attention.1} parent=1 // pred_check
      _
    $region7: #{multihead_attention.1} parent=1 // pred_check_branch
      %17 = sbr.rel (0) target = $region9
    $region8: #{multihead_attention.1} parent=1 // pred_region
      _
    $region9: #{multihead_attention.1} parent=1 // pred_fallthru
      _
    // Predicated region
    $region10: #{multihead_attention.1} parent=1 // pred_check
      _
    $region11: #{multihead_attention.1} parent=1 // pred_check_branch
      %19 = sbr.rel (0) target = $region13
    $region12: #{multihead_attention.1} parent=1 // pred_region
      _
    $region13: #{multihead_attention.1} parent=1 // pred_fallthru
      _
    // Predicated region
    $region14: #{multihead_attention.1} parent=1 // pred_check
      _
    $region15: #{multihead_attention.1} parent=1 // pred_check_branch
      %21 = sbr.rel (0) target = $region17
    $region16: #{multihead_attention.1} parent=1 // pred_region
      _
    $region17: #{multihead_attention.1} parent=1 // pred_fallthru
      _
    // Predicated region
    $region18: #{multihead_attention.1} parent=1 // pred_check
      _
    $region19: #{multihead_attention.1} parent=1 // pred_check_branch
      %23 = sbr.rel (0) target = $region21
    $region20: #{multihead_attention.1} parent=1 // pred_region
      _
    $region21: #{multihead_attention.1} parent=1 // pred_fallthru
      _
    // Predicated region
    $region22: #{multihead_attention.1} parent=1 // pred_check
      _
    $region23: #{multihead_attention.1} parent=1 // pred_check_branch
      %25 = sbr.rel (0) target = $region25
    $region24: #{multihead_attention.1} parent=1 // pred_region
      _
    $region25: #{multihead_attention.1} parent=1 // pred_fallthru
      _
    // Predicated region
    $region26: #{multihead_attention.1} parent=1 // pred_check
      _
    $region27: #{multihead_attention.1} parent=1 // pred_check_branch
      %27 = sbr.rel (0) target = $region29
    $region28: #{multihead_attention.1} parent=1 // pred_region
      _
    $region29: #{multihead_attention.1} parent=1 // pred_fallthru
      _
    // Predicated region
    $region30: #{multihead_attention.1} parent=1 // pred_check
      _
    $region31: #{multihead_attention.1} parent=1 // pred_check_branch
      %29 = sbr.rel (0) target = $region33
    $region32: #{multihead_attention.1} parent=1 // pred_region
      _
    $region33: #{multihead_attention.1} parent=1 // pred_fallthru
      _
    %v30 = vld [vmem:[%s0] sm:$0xff]
    %v31 = vld [vmem:[%s0 + $0x8] sm:$0xff]
    %v32 = vld [vmem:[%s3] sm:$0xff]
    %v33 = vld [vmem:[%s3 + $0x8] sm:$0xff]
    %v34 = vld [vmem:[%s3 + $0x10] sm:$0xff]
    %v35 = vld [vmem:[%s3 + $0x18] sm:$0xff]
    %v36 = vld [vmem:[%s3 + $0x20] sm:$0xff]
    %v37 = vld [vmem:[%s3 + $0x28] sm:$0xff]
    %v38 = vld [vmem:[%s3 + $0x30] sm:$0xff]
    %v39 = vld [vmem:[%s3 + $0x38] sm:$0xff]
    %v40 = vld [vmem:[%s4] sm:$0xff]
    %v41 = vld [vmem:[%s4 + $0x8] sm:$0xff]
    %v42 = vld [vmem:[%s4 + $0x10] sm:$0xff]
    %v43 = vld [vmem:[%s4 + $0x18] sm:$0xff]
    %v44 = vld [vmem:[%s4 + $0x20] sm:$0xff]
    %v45 = vld [vmem:[%s4 + $0x28] sm:$0xff]
    %v46 = vld [vmem:[%s4 + $0x30] sm:$0xff]
    %v47 = vld [vmem:[%s4 + $0x38] sm:$0xff]
    %49 = vset.pattern.permute.xlu0 0
    %50 = vperm.xlu0 %49, %v40
    %v51 = vpop.permute.xlu0 %50
    %54 = vset.pattern.permute.xlu0 0
    %55 = vperm.xlu0 %54, %v41
    %v56 = vpop.permute.xlu0 %55
    %59 = vset.pattern.permute.xlu0 0
    %60 = vperm.xlu0 %59, %v42
    %v61 = vpop.permute.xlu0 %60
    %64 = vset.pattern.permute.xlu0 0
    %65 = vperm.xlu0 %64, %v43
    %v66 = vpop.permute.xlu0 %65
    %69 = vset.pattern.permute.xlu0 0
    %70 = vperm.xlu0 %69, %v44
    %v71 = vpop.permute.xlu0 %70
    %74 = vset.pattern.permute.xlu0 0
    %75 = vperm.xlu0 %74, %v45
    %v76 = vpop.permute.xlu0 %75
    %79 = vset.pattern.permute.xlu0 0
    %80 = vperm.xlu0 %79, %v46
    %v81 = vpop.permute.xlu0 %80
    %84 = vset.pattern.permute.xlu0 0
    %85 = vperm.xlu0 %84, %v47
    %v86 = vpop.permute.xlu0 %85
    %vm88 = vcmask 261120
    %v90 = vsel %vm88, %v32, 0
    %v93 = vsel %vm88, %v33, 0
    %v96 = vsel %vm88, %v34, 0
    %v99 = vsel %vm88, %v35, 0
    %v102 = vsel %vm88, %v36, 0
    %v105 = vsel %vm88, %v37, 0
    %v108 = vsel %vm88, %v38, 0
    %v111 = vsel %vm88, %v39, 0
    %v114 = vsel %vm88, %v30, 0
    %v117 = vsel %vm88, %v31, 0
    %119 = vmatpush.xpose.msra.mxu0 0.0
    %120 = vmatpush.xpose.msra.mxu0 0.0
    %121 = vmatpush.xpose.msra.mxu0 0.0
    %122 = vmatpush.xpose.msra.mxu0 0.0
    %123 = vmatpush.xpose.msra.mxu0 0.0
    %124 = vmatpush.xpose.msra.mxu0 0.0
    %125 = vmatpush.xpose.msra.mxu0 0.0
    %126 = vmatpush.xpose.msra.mxu0 0.0
    %127 = vmatpush.xpose.msra.mxu0 0.0
    %128 = vmatpush.xpose.msra.mxu0 0.0
    %129 = vmatpush.xpose.msra.mxu0 0.0
    %130 = vmatpush.xpose.msra.mxu0 0.0
    %131 = vmatpush.xpose.msra.mxu0 0.0
    %132 = vmatpush.xpose.msra.mxu0 0.0
    %133 = vmatpush.xpose.msra.mxu0 %v117
    %134 = vmatpush.xpose.msra.mxu0 %v114
    %135 = vmatmul.f32.gmra.mxu0 %v90
    %v136 = vpop.f32.mrf.mxu0
    %v137 = vadd.f32 %v51, %v136
    %138 = vmatmul.f32.gmra.mxu0 %v93
    %v139 = vpop.f32.mrf.mxu0
    %v140 = vadd.f32 %v56, %v139
    %141 = vmatmul.f32.gmra.mxu0 %v96
    %v142 = vpop.f32.mrf.mxu0
    %v143 = vadd.f32 %v61, %v142
    %144 = vmatmul.f32.gmra.mxu0 %v99
    %v145 = vpop.f32.mrf.mxu0
    %v146 = vadd.f32 %v66, %v145
    %147 = vmatmul.f32.gmra.mxu0 %v102
    %v148 = vpop.f32.mrf.mxu0
    %v149 = vadd.f32 %v71, %v148
    %150 = vmatmul.f32.gmra.mxu0 %v105
    %v151 = vpop.f32.mrf.mxu0
    %v152 = vadd.f32 %v76, %v151
    %153 = vmatmul.f32.gmra.mxu0 %v108
    %v154 = vpop.f32.mrf.mxu0
    %v155 = vadd.f32 %v81, %v154
    %156 = vmatmul.f32.gmra.mxu0 %v111
    %v157 = vpop.f32.mrf.mxu0
    %v158 = vadd.f32 %v86, %v157
    %159 = vdwg.mxu0
    %v160 = vld [vmem:[%s5] sm:$0xff]
    %v161 = vld [vmem:[%s5 + $0x8] sm:$0xff]
    %v162 = vld [vmem:[%s5 + $0x10] sm:$0xff]
    %v163 = vld [vmem:[%s5 + $0x18] sm:$0xff]
    %v164 = vld [vmem:[%s7] sm:$0xff]
    %v165 = vld [vmem:[%s7 + $0x8] sm:$0xff]
    %v166 = vld [vmem:[%s1] sm:$0xff]
    %v167 = vld [vmem:[%s1 + $0x8] sm:$0xff]
    %v168 = vld [vmem:[%s1 + $0x10] sm:$0xff]
    %v169 = vld [vmem:[%s1 + $0x18] sm:$0xff]
    %v170 = vld [vmem:[%s2] sm:$0x1]
    %v172 = vperm.slane %v170, 0
    %174 = vmatpush.msra.mxu0 0.0
    %175 = vmatpush.msra.mxu0 0.0
    %176 = vmatpush.msra.mxu0 0.0
    %177 = vmatpush.msra.mxu0 0.0
    %178 = vmatpush.msra.mxu0 0.0
    %179 = vmatpush.msra.mxu0 0.0
    %180 = vmatpush.msra.mxu0 0.0
    %181 = vmatpush.msra.mxu0 0.0
    %182 = vmatpush.msra.mxu0 0.0
    %183 = vmatpush.msra.mxu0 0.0
    %184 = vmatpush.msra.mxu0 0.0
    %185 = vmatpush.msra.mxu0 0.0
    %186 = vmatpush.msra.mxu0 %v169
    %187 = vmatpush.msra.mxu0 %v168
    %188 = vmatpush.msra.mxu0 %v167
    %189 = vmatpush.msra.mxu0 %v166
    %190 = vmatmul.f32.gmra.mxu0 %v114
    %v191 = vpop.f32.mrf.mxu0
    %v192 = vadd.f32 %v172, %v191
    %193 = vmatmul.f32.gmra.mxu0 %v117
    %v194 = vpop.f32.mrf.mxu0
    %v195 = vadd.f32 %v172, %v194
    %196 = vdwg.mxu0
    %vm197 = vcmask 64512
    %v199 = vsel %vm197, %v192, 0
    %v202 = vsel %vm197, %v195, 0
    %204 = vmatpush.msra.mxu0 0.0
    %205 = vmatpush.msra.mxu0 0.0
    %206 = vmatpush.msra.mxu0 0.0
    %207 = vmatpush.msra.mxu0 0.0
    %208 = vmatpush.msra.mxu0 0.0
    %209 = vmatpush.msra.mxu0 0.0
    %210 = vmatpush.msra.mxu0 0.0
    %211 = vmatpush.msra.mxu0 0.0
    %212 = vmatpush.msra.mxu0 0.0
    %213 = vmatpush.msra.mxu0 0.0
    %214 = vmatpush.msra.mxu0 0.0
    %215 = vmatpush.msra.mxu0 0.0
    %216 = vmatpush.msra.mxu0 0.0
    %217 = vmatpush.msra.mxu0 0.0
    %218 = vmatpush.msra.mxu0 0.0
    %219 = vmatpush.msra.mxu0 %v137
    %220 = vmatmul.f32.gmra.mxu0 %v199
    %v221 = vpop.f32.mrf.mxu0
    %v222 = vadd.f32 %v164, %v221
    %223 = vmatmul.f32.gmra.mxu0 %v202
    %v224 = vpop.f32.mrf.mxu0
    %v225 = vadd.f32 %v165, %v224
    %226 = vdwg.mxu0
    %vm227 = vcmask 130048
    %v228 = vsel %vm227, %v222, -inf
    %229 = vmax.xlane.f32.xlu0 %v228
    %v230 = vpop.xlane.xlu0 %229
    %v231 = vsel %vm227, %v225, -inf
    %232 = vmax.xlane.f32.xlu0 %v231
    %v233 = vpop.xlane.xlu0 %232
    %v234 = vsub.f32 %v222, %v230
    %v235 = vsub.f32 %v225, %v233
    %v236 = vmul.f32 %v234, 1.442695
    %v237 = vpow.pop %v236
    %v238 = vmul.f32 %v235, 1.442695
    %v239 = vpow.pop %v238
    %v240 = vsel %vm227, %v237, 0.0
    %241 = vadd.xlane.f32.xlu0 %v240
    %v242 = vpop.xlane.xlu0 %241
    %v243 = vsel %vm227, %v239, 0.0
    %244 = vadd.xlane.f32.xlu0 %v243
    %v245 = vpop.xlane.xlu0 %244
    %v246 = vrcp.pop %v242
    %v247 = vmul.f32 %v242, %v246
    %v248 = vsub.f32 1.0, %v247
    %v249 = vmul.f32 %v246, %v248
    %v250 = vadd.f32 %v246, %v249
    %vm251 = vweird.f32 %v242
    %vm252 = vweird.f32 %v246
    %vm253 = vmor %vm251, %vm252
    %v254 = vsel %vm253, %v246, %v250
    %v255 = vand.u32 2147483647, %v242
    %vm256 = vcmp.eq.f32.partialorder %v255, 8.507059e+37
    %v257 = vand.u32 %v242, 2147483648
    %v258 = vor.u32 1.1754944e-38, %v257
    %v259 = vsel %vm256, %v258, %v254
    %v260 = vrcp.pop %v245
    %v261 = vmul.f32 %v245, %v260
    %v262 = vsub.f32 1.0, %v261
    %v263 = vmul.f32 %v260, %v262
    %v264 = vadd.f32 %v260, %v263
    %vm265 = vweird.f32 %v245
    %vm266 = vweird.f32 %v260
    %vm267 = vmor %vm265, %vm266
    %v268 = vsel %vm267, %v260, %v264
    %v269 = vand.u32 2147483647, %v245
    %vm270 = vcmp.eq.f32.partialorder %v269, 8.507059e+37
    %v271 = vand.u32 %v245, 2147483648
    %v272 = vor.u32 1.1754944e-38, %v271
    %v273 = vsel %vm270, %v272, %v268
    %v274 = vmul.f32 %v237, %v259
    %v275 = vmul.f32 %v239, %v273
    %v277 = vsel %vm227, %v274, 0
    %v280 = vsel %vm227, %v275, 0
    %v283 = vsel %vm227, %v149, 0
    %285 = vmatpush.xpose.msra.mxu0 0.0
    %286 = vmatpush.xpose.msra.mxu0 0.0
    %287 = vmatpush.xpose.msra.mxu0 0.0
    %288 = vmatpush.xpose.msra.mxu0 0.0
    %289 = vmatpush.xpose.msra.mxu0 0.0
    %290 = vmatpush.xpose.msra.mxu0 0.0
    %291 = vmatpush.xpose.msra.mxu0 0.0
    %292 = vmatpush.xpose.msra.mxu0 0.0
    %293 = vmatpush.xpose.msra.mxu0 0.0
    %294 = vmatpush.xpose.msra.mxu0 0.0
    %295 = vmatpush.xpose.msra.mxu0 0.0
    %296 = vmatpush.xpose.msra.mxu0 0.0
    %297 = vmatpush.xpose.msra.mxu0 0.0
    %298 = vmatpush.xpose.msra.mxu0 0.0
    %299 = vmatpush.xpose.msra.mxu0 0.0
    %300 = vmatpush.xpose.msra.mxu0 %v283
    %301 = vmatmul.f32.gmra.mxu0 %v277
    %v302 = vpop.f32.mrf.mxu0
    %v303 = vadd.f32 0.0, %v302
    %304 = vmatmul.f32.gmra.mxu0 %v280
    %v305 = vpop.f32.mrf.mxu0
    %v306 = vadd.f32 0.0, %v305
    %307 = vdwg.mxu0
    %s308 = scalar_lea.vmem %s1, 32
    %v309 = vld [vmem:[%s308] sm:$0xff]
    %v310 = vld [vmem:[%s308 + $0x8] sm:$0xff]
    %v311 = vld [vmem:[%s308 + $0x10] sm:$0xff]
    %v312 = vld [vmem:[%s308 + $0x18] sm:$0xff]
    %s313 = scalar_lea.vmem %s2, 1
    %v314 = vld [vmem:[%s313] sm:$0x1]
    %v316 = vperm.slane %v314, 0
    %318 = vmatpush.msra.mxu0 0.0
    %319 = vmatpush.msra.mxu0 0.0
    %320 = vmatpush.msra.mxu0 0.0
    %321 = vmatpush.msra.mxu0 0.0
    %322 = vmatpush.msra.mxu0 0.0
    %323 = vmatpush.msra.mxu0 0.0
    %324 = vmatpush.msra.mxu0 0.0
    %325 = vmatpush.msra.mxu0 0.0
    %326 = vmatpush.msra.mxu0 0.0
    %327 = vmatpush.msra.mxu0 0.0
    %328 = vmatpush.msra.mxu0 0.0
    %329 = vmatpush.msra.mxu0 0.0
    %330 = vmatpush.msra.mxu0 %v312
    %331 = vmatpush.msra.mxu0 %v311
    %332 = vmatpush.msra.mxu0 %v310
    %333 = vmatpush.msra.mxu0 %v309
    %334 = vmatmul.f32.gmra.mxu0 %v114
    %v335 = vpop.f32.mrf.mxu0
    %v336 = vadd.f32 %v316, %v335
    %337 = vmatmul.f32.gmra.mxu0 %v117
    %v338 = vpop.f32.mrf.mxu0
    %v339 = vadd.f32 %v316, %v338
    %340 = vdwg.mxu0
    %v342 = vsel %vm197, %v336, 0
    %v345 = vsel %vm197, %v339, 0
    %347 = vmatpush.msra.mxu0 0.0
    %348 = vmatpush.msra.mxu0 0.0
    %349 = vmatpush.msra.mxu0 0.0
    %350 = vmatpush.msra.mxu0 0.0
    %351 = vmatpush.msra.mxu0 0.0
    %352 = vmatpush.msra.mxu0 0.0
    %353 = vmatpush.msra.mxu0 0.0
    %354 = vmatpush.msra.mxu0 0.0
    %355 = vmatpush.msra.mxu0 0.0
    %356 = vmatpush.msra.mxu0 0.0
    %357 = vmatpush.msra.mxu0 0.0
    %358 = vmatpush.msra.mxu0 0.0
    %359 = vmatpush.msra.mxu0 0.0
    %360 = vmatpush.msra.mxu0 0.0
    %361 = vmatpush.msra.mxu0 0.0
    %362 = vmatpush.msra.mxu0 %v140
    %363 = vmatmul.f32.gmra.mxu0 %v342
    %v364 = vpop.f32.mrf.mxu0
    %v365 = vadd.f32 %v164, %v364
    %366 = vmatmul.f32.gmra.mxu0 %v345
    %v367 = vpop.f32.mrf.mxu0
    %v368 = vadd.f32 %v165, %v367
    %369 = vdwg.mxu0
    %v370 = vsel %vm227, %v365, -inf
    %371 = vmax.xlane.f32.xlu0 %v370
    %v372 = vpop.xlane.xlu0 %371
    %v373 = vsel %vm227, %v368, -inf
    %374 = vmax.xlane.f32.xlu0 %v373
    %v375 = vpop.xlane.xlu0 %374
    %v376 = vsub.f32 %v365, %v372
    %v377 = vsub.f32 %v368, %v375
    %v378 = vmul.f32 %v376, 1.442695
    %v379 = vpow.pop %v378
    %v380 = vmul.f32 %v377, 1.442695
    %v381 = vpow.pop %v380
    %v382 = vsel %vm227, %v379, 0.0
    %383 = vadd.xlane.f32.xlu0 %v382
    %v384 = vpop.xlane.xlu0 %383
    %v385 = vsel %vm227, %v381, 0.0
    %386 = vadd.xlane.f32.xlu0 %v385
    %v387 = vpop.xlane.xlu0 %386
    %v388 = vrcp.pop %v384
    %v389 = vmul.f32 %v384, %v388
    %v390 = vsub.f32 1.0, %v389
    %v391 = vmul.f32 %v388, %v390
    %v392 = vadd.f32 %v388, %v391
    %vm393 = vweird.f32 %v384
    %vm394 = vweird.f32 %v388
    %vm395 = vmor %vm393, %vm394
    %v396 = vsel %vm395, %v388, %v392
    %v397 = vand.u32 2147483647, %v384
    %vm398 = vcmp.eq.f32.partialorder %v397, 8.507059e+37
    %v399 = vand.u32 %v384, 2147483648
    %v400 = vor.u32 1.1754944e-38, %v399
    %v401 = vsel %vm398, %v400, %v396
    %v402 = vrcp.pop %v387
    %v403 = vmul.f32 %v387, %v402
    %v404 = vsub.f32 1.0, %v403
    %v405 = vmul.f32 %v402, %v404
    %v406 = vadd.f32 %v402, %v405
    %vm407 = vweird.f32 %v387
    %vm408 = vweird.f32 %v402
    %vm409 = vmor %vm407, %vm408
    %v410 = vsel %vm409, %v402, %v406
    %v411 = vand.u32 2147483647, %v387
    %vm412 = vcmp.eq.f32.partialorder %v411, 8.507059e+37
    %v413 = vand.u32 %v387, 2147483648
    %v414 = vor.u32 1.1754944e-38, %v413
    %v415 = vsel %vm412, %v414, %v410
    %v416 = vmul.f32 %v379, %v401
    %v417 = vmul.f32 %v381, %v415
    %v419 = vsel %vm227, %v416, 0
    %v422 = vsel %vm227, %v417, 0
    %v425 = vsel %vm227, %v152, 0
    %427 = vmatpush.xpose.msra.mxu0 0.0
    %428 = vmatpush.xpose.msra.mxu0 0.0
    %429 = vmatpush.xpose.msra.mxu0 0.0
    %430 = vmatpush.xpose.msra.mxu0 0.0
    %431 = vmatpush.xpose.msra.mxu0 0.0
    %432 = vmatpush.xpose.msra.mxu0 0.0
    %433 = vmatpush.xpose.msra.mxu0 0.0
    %434 = vmatpush.xpose.msra.mxu0 0.0
    %435 = vmatpush.xpose.msra.mxu0 0.0
    %436 = vmatpush.xpose.msra.mxu0 0.0
    %437 = vmatpush.xpose.msra.mxu0 0.0
    %438 = vmatpush.xpose.msra.mxu0 0.0
    %439 = vmatpush.xpose.msra.mxu0 0.0
    %440 = vmatpush.xpose.msra.mxu0 0.0
    %441 = vmatpush.xpose.msra.mxu0 0.0
    %442 = vmatpush.xpose.msra.mxu0 %v425
    %443 = vmatmul.f32.gmra.mxu0 %v419
    %v444 = vpop.f32.mrf.mxu0
    %v445 = vadd.f32 0.0, %v444
    %446 = vmatmul.f32.gmra.mxu0 %v422
    %v447 = vpop.f32.mrf.mxu0
    %v448 = vadd.f32 0.0, %v447
    %449 = vdwg.mxu0
    %v451 = vsel %vm197, %v445, 0
    %v454 = vsel %vm197, %v448, 0
    %456 = vmatpush.msra.mxu0 0.0
    %457 = vmatpush.msra.mxu0 0.0
    %458 = vmatpush.msra.mxu0 0.0
    %459 = vmatpush.msra.mxu0 0.0
    %460 = vmatpush.msra.mxu0 0.0
    %461 = vmatpush.msra.mxu0 0.0
    %462 = vmatpush.msra.mxu0 0.0
    %463 = vmatpush.msra.mxu0 0.0
    %464 = vmatpush.msra.mxu0 0.0
    %465 = vmatpush.msra.mxu0 0.0
    %466 = vmatpush.msra.mxu0 0.0
    %467 = vmatpush.msra.mxu0 0.0
    %468 = vmatpush.msra.mxu0 0.0
    %469 = vmatpush.msra.mxu0 0.0
    %470 = vmatpush.msra.mxu0 0.0
    %471 = vmatpush.msra.mxu0 %v161
    %472 = vmatmul.f32.gmra.mxu0 %v451
    %v473 = vpop.f32.mrf.mxu0
    %v474 = vadd.f32 0.0, %v473
    %475 = vmatmul.f32.gmra.mxu0 %v454
    %v476 = vpop.f32.mrf.mxu0
    %v477 = vadd.f32 0.0, %v476
    %478 = vdwg.mxu0
    %v480 = vsel %vm197, %v303, 0
    %v483 = vsel %vm197, %v306, 0
    %485 = vmatpush.msra.mxu0 0.0
    %486 = vmatpush.msra.mxu0 0.0
    %487 = vmatpush.msra.mxu0 0.0
    %488 = vmatpush.msra.mxu0 0.0
    %489 = vmatpush.msra.mxu0 0.0
    %490 = vmatpush.msra.mxu0 0.0
    %491 = vmatpush.msra.mxu0 0.0
    %492 = vmatpush.msra.mxu0 0.0
    %493 = vmatpush.msra.mxu0 0.0
    %494 = vmatpush.msra.mxu0 0.0
    %495 = vmatpush.msra.mxu0 0.0
    %496 = vmatpush.msra.mxu0 0.0
    %497 = vmatpush.msra.mxu0 0.0
    %498 = vmatpush.msra.mxu0 0.0
    %499 = vmatpush.msra.mxu0 0.0
    %500 = vmatpush.msra.mxu0 %v160
    %501 = vmatmul.f32.gmra.mxu0 %v480
    %v502 = vpop.f32.mrf.mxu0
    %v503 = vadd.f32 %v474, %v502
    %504 = vmatmul.f32.gmra.mxu0 %v483
    %v505 = vpop.f32.mrf.mxu0
    %v506 = vadd.f32 %v477, %v505
    %507 = vdwg.mxu0
    %s508 = scalar_lea.vmem %s1, 64
    %v509 = vld [vmem:[%s508] sm:$0xff]
    %v510 = vld [vmem:[%s508 + $0x8] sm:$0xff]
    %v511 = vld [vmem:[%s508 + $0x10] sm:$0xff]
    %v512 = vld [vmem:[%s508 + $0x18] sm:$0xff]
    %s513 = scalar_lea.vmem %s2, 2
    %v514 = vld [vmem:[%s513] sm:$0x1]
    %v516 = vperm.slane %v514, 0
    %518 = vmatpush.msra.mxu0 0.0
    %519 = vmatpush.msra.mxu0 0.0
    %520 = vmatpush.msra.mxu0 0.0
    %521 = vmatpush.msra.mxu0 0.0
    %522 = vmatpush.msra.mxu0 0.0
    %523 = vmatpush.msra.mxu0 0.0
    %524 = vmatpush.msra.mxu0 0.0
    %525 = vmatpush.msra.mxu0 0.0
    %526 = vmatpush.msra.mxu0 0.0
    %527 = vmatpush.msra.mxu0 0.0
    %528 = vmatpush.msra.mxu0 0.0
    %529 = vmatpush.msra.mxu0 0.0
    %530 = vmatpush.msra.mxu0 %v512
    %531 = vmatpush.msra.mxu0 %v511
    %532 = vmatpush.msra.mxu0 %v510
    %533 = vmatpush.msra.mxu0 %v509
    %534 = vmatmul.f32.gmra.mxu0 %v114
    %v535 = vpop.f32.mrf.mxu0
    %v536 = vadd.f32 %v516, %v535
    %537 = vmatmul.f32.gmra.mxu0 %v117
    %v538 = vpop.f32.mrf.mxu0
    %v539 = vadd.f32 %v516, %v538
    %540 = vdwg.mxu0
    %v542 = vsel %vm197, %v536, 0
    %v545 = vsel %vm197, %v539, 0
    %547 = vmatpush.msra.mxu0 0.0
    %548 = vmatpush.msra.mxu0 0.0
    %549 = vmatpush.msra.mxu0 0.0
    %550 = vmatpush.msra.mxu0 0.0
    %551 = vmatpush.msra.mxu0 0.0
    %552 = vmatpush.msra.mxu0 0.0
    %553 = vmatpush.msra.mxu0 0.0
    %554 = vmatpush.msra.mxu0 0.0
    %555 = vmatpush.msra.mxu0 0.0
    %556 = vmatpush.msra.mxu0 0.0
    %557 = vmatpush.msra.mxu0 0.0
    %558 = vmatpush.msra.mxu0 0.0
    %559 = vmatpush.msra.mxu0 0.0
    %560 = vmatpush.msra.mxu0 0.0
    %561 = vmatpush.msra.mxu0 0.0
    %562 = vmatpush.msra.mxu0 %v143
    %563 = vmatmul.f32.gmra.mxu0 %v542
    %v564 = vpop.f32.mrf.mxu0
    %v565 = vadd.f32 %v164, %v564
    %566 = vmatmul.f32.gmra.mxu0 %v545
    %v567 = vpop.f32.mrf.mxu0
    %v568 = vadd.f32 %v165, %v567
    %569 = vdwg.mxu0
    %v570 = vsel %vm227, %v565, -inf
    %571 = vmax.xlane.f32.xlu0 %v570
    %v572 = vpop.xlane.xlu0 %571
    %v573 = vsel %vm227, %v568, -inf
    %574 = vmax.xlane.f32.xlu0 %v573
    %v575 = vpop.xlane.xlu0 %574
    %v576 = vsub.f32 %v565, %v572
    %v577 = vsub.f32 %v568, %v575
    %v578 = vmul.f32 %v576, 1.442695
    %v579 = vpow.pop %v578
    %v580 = vmul.f32 %v577, 1.442695
    %v581 = vpow.pop %v580
    %v582 = vsel %vm227, %v579, 0.0
    %583 = vadd.xlane.f32.xlu0 %v582
    %v584 = vpop.xlane.xlu0 %583
    %v585 = vsel %vm227, %v581, 0.0
    %586 = vadd.xlane.f32.xlu0 %v585
    %v587 = vpop.xlane.xlu0 %586
    %v588 = vrcp.pop %v584
    %v589 = vmul.f32 %v584, %v588
    %v590 = vsub.f32 1.0, %v589
    %v591 = vmul.f32 %v588, %v590
    %v592 = vadd.f32 %v588, %v591
    %vm593 = vweird.f32 %v584
    %vm594 = vweird.f32 %v588
    %vm595 = vmor %vm593, %vm594
    %v596 = vsel %vm595, %v588, %v592
    %v597 = vand.u32 2147483647, %v584
    %vm598 = vcmp.eq.f32.partialorder %v597, 8.507059e+37
    %v599 = vand.u32 %v584, 2147483648
    %v600 = vor.u32 1.1754944e-38, %v599
    %v601 = vsel %vm598, %v600, %v596
    %v602 = vrcp.pop %v587
    %v603 = vmul.f32 %v587, %v602
    %v604 = vsub.f32 1.0, %v603
    %v605 = vmul.f32 %v602, %v604
    %v606 = vadd.f32 %v602, %v605
    %vm607 = vweird.f32 %v587
    %vm608 = vweird.f32 %v602
    %vm609 = vmor %vm607, %vm608
    %v610 = vsel %vm609, %v602, %v606
    %v611 = vand.u32 2147483647, %v587
    %vm612 = vcmp.eq.f32.partialorder %v611, 8.507059e+37
    %v613 = vand.u32 %v587, 2147483648
    %v614 = vor.u32 1.1754944e-38, %v613
    %v615 = vsel %vm612, %v614, %v610
    %v616 = vmul.f32 %v579, %v601
    %v617 = vmul.f32 %v581, %v615
    %v619 = vsel %vm227, %v616, 0
    %v622 = vsel %vm227, %v617, 0
    %v625 = vsel %vm227, %v155, 0
    %627 = vmatpush.xpose.msra.mxu0 0.0
    %628 = vmatpush.xpose.msra.mxu0 0.0
    %629 = vmatpush.xpose.msra.mxu0 0.0
    %630 = vmatpush.xpose.msra.mxu0 0.0
    %631 = vmatpush.xpose.msra.mxu0 0.0
    %632 = vmatpush.xpose.msra.mxu0 0.0
    %633 = vmatpush.xpose.msra.mxu0 0.0
    %634 = vmatpush.xpose.msra.mxu0 0.0
    %635 = vmatpush.xpose.msra.mxu0 0.0
    %636 = vmatpush.xpose.msra.mxu0 0.0
    %637 = vmatpush.xpose.msra.mxu0 0.0
    %638 = vmatpush.xpose.msra.mxu0 0.0
    %639 = vmatpush.xpose.msra.mxu0 0.0
    %640 = vmatpush.xpose.msra.mxu0 0.0
    %641 = vmatpush.xpose.msra.mxu0 0.0
    %642 = vmatpush.xpose.msra.mxu0 %v625
    %643 = vmatmul.f32.gmra.mxu0 %v619
    %v644 = vpop.f32.mrf.mxu0
    %v645 = vadd.f32 0.0, %v644
    %646 = vmatmul.f32.gmra.mxu0 %v622
    %v647 = vpop.f32.mrf.mxu0
    %v648 = vadd.f32 0.0, %v647
    %649 = vdwg.mxu0
    %v651 = vsel %vm197, %v645, 0
    %v654 = vsel %vm197, %v648, 0
    %656 = vmatpush.msra.mxu0 0.0
    %657 = vmatpush.msra.mxu0 0.0
    %658 = vmatpush.msra.mxu0 0.0
    %659 = vmatpush.msra.mxu0 0.0
    %660 = vmatpush.msra.mxu0 0.0
    %661 = vmatpush.msra.mxu0 0.0
    %662 = vmatpush.msra.mxu0 0.0
    %663 = vmatpush.msra.mxu0 0.0
    %664 = vmatpush.msra.mxu0 0.0
    %665 = vmatpush.msra.mxu0 0.0
    %666 = vmatpush.msra.mxu0 0.0
    %667 = vmatpush.msra.mxu0 0.0
    %668 = vmatpush.msra.mxu0 0.0
    %669 = vmatpush.msra.mxu0 0.0
    %670 = vmatpush.msra.mxu0 0.0
    %671 = vmatpush.msra.mxu0 %v162
    %672 = vmatmul.f32.gmra.mxu0 %v651
    %v673 = vpop.f32.mrf.mxu0
    %v674 = vadd.f32 0.0, %v673
    %675 = vmatmul.f32.gmra.mxu0 %v654
    %v676 = vpop.f32.mrf.mxu0
    %v677 = vadd.f32 0.0, %v676
    %678 = vdwg.mxu0
    %v679 = vadd.f32 %v503, %v674
    %v680 = vadd.f32 %v506, %v677
    %s681 = scalar_lea.vmem %s1, 96
    %v682 = vld [vmem:[%s681] sm:$0xff]
    %v683 = vld [vmem:[%s681 + $0x8] sm:$0xff]
    %v684 = vld [vmem:[%s681 + $0x10] sm:$0xff]
    %v685 = vld [vmem:[%s681 + $0x18] sm:$0xff]
    %s686 = scalar_lea.vmem %s2, 3
    %v687 = vld [vmem:[%s686] sm:$0x1]
    %v689 = vperm.slane %v687, 0
    %691 = vmatpush.msra.mxu0 0.0
    %692 = vmatpush.msra.mxu0 0.0
    %693 = vmatpush.msra.mxu0 0.0
    %694 = vmatpush.msra.mxu0 0.0
    %695 = vmatpush.msra.mxu0 0.0
    %696 = vmatpush.msra.mxu0 0.0
    %697 = vmatpush.msra.mxu0 0.0
    %698 = vmatpush.msra.mxu0 0.0
    %699 = vmatpush.msra.mxu0 0.0
    %700 = vmatpush.msra.mxu0 0.0
    %701 = vmatpush.msra.mxu0 0.0
    %702 = vmatpush.msra.mxu0 0.0
    %703 = vmatpush.msra.mxu0 %v685
    %704 = vmatpush.msra.mxu0 %v684
    %705 = vmatpush.msra.mxu0 %v683
    %706 = vmatpush.msra.mxu0 %v682
    %707 = vmatmul.f32.gmra.mxu0 %v114
    %v708 = vpop.f32.mrf.mxu0
    %v709 = vadd.f32 %v689, %v708
    %710 = vmatmul.f32.gmra.mxu0 %v117
    %v711 = vpop.f32.mrf.mxu0
    %v712 = vadd.f32 %v689, %v711
    %713 = vdwg.mxu0
    %v715 = vsel %vm197, %v709, 0
    %v718 = vsel %vm197, %v712, 0
    %720 = vmatpush.msra.mxu0 0.0
    %721 = vmatpush.msra.mxu0 0.0
    %722 = vmatpush.msra.mxu0 0.0
    %723 = vmatpush.msra.mxu0 0.0
    %724 = vmatpush.msra.mxu0 0.0
    %725 = vmatpush.msra.mxu0 0.0
    %726 = vmatpush.msra.mxu0 0.0
    %727 = vmatpush.msra.mxu0 0.0
    %728 = vmatpush.msra.mxu0 0.0
    %729 = vmatpush.msra.mxu0 0.0
    %730 = vmatpush.msra.mxu0 0.0
    %731 = vmatpush.msra.mxu0 0.0
    %732 = vmatpush.msra.mxu0 0.0
    %733 = vmatpush.msra.mxu0 0.0
    %734 = vmatpush.msra.mxu0 0.0
    %735 = vmatpush.msra.mxu0 %v146
    %736 = vmatmul.f32.gmra.mxu0 %v715
    %v737 = vpop.f32.mrf.mxu0
    %v738 = vadd.f32 %v164, %v737
    %739 = vmatmul.f32.gmra.mxu0 %v718
    %v740 = vpop.f32.mrf.mxu0
    %v741 = vadd.f32 %v165, %v740
    %742 = vdwg.mxu0
    %v743 = vsel %vm227, %v738, -inf
    %744 = vmax.xlane.f32.xlu0 %v743
    %v745 = vpop.xlane.xlu0 %744
    %v746 = vsel %vm227, %v741, -inf
    %747 = vmax.xlane.f32.xlu0 %v746
    %v748 = vpop.xlane.xlu0 %747
    %v749 = vsub.f32 %v738, %v745
    %v750 = vsub.f32 %v741, %v748
    %v751 = vmul.f32 %v749, 1.442695
    %v752 = vpow.pop %v751
    %v753 = vmul.f32 %v750, 1.442695
    %v754 = vpow.pop %v753
    %v755 = vsel %vm227, %v752, 0.0
    %756 = vadd.xlane.f32.xlu0 %v755
    %v757 = vpop.xlane.xlu0 %756
    %v758 = vsel %vm227, %v754, 0.0
    %759 = vadd.xlane.f32.xlu0 %v758
    %v760 = vpop.xlane.xlu0 %759
    %v761 = vrcp.pop %v757
    %v762 = vmul.f32 %v757, %v761
    %v763 = vsub.f32 1.0, %v762
    %v764 = vmul.f32 %v761, %v763
    %v765 = vadd.f32 %v761, %v764
    %vm766 = vweird.f32 %v757
    %vm767 = vweird.f32 %v761
    %vm768 = vmor %vm766, %vm767
    %v769 = vsel %vm768, %v761, %v765
    %v770 = vand.u32 2147483647, %v757
    %vm771 = vcmp.eq.f32.partialorder %v770, 8.507059e+37
    %v772 = vand.u32 %v757, 2147483648
    %v773 = vor.u32 1.1754944e-38, %v772
    %v774 = vsel %vm771, %v773, %v769
    %v775 = vrcp.pop %v760
    %v776 = vmul.f32 %v760, %v775
    %v777 = vsub.f32 1.0, %v776
    %v778 = vmul.f32 %v775, %v777
    %v779 = vadd.f32 %v775, %v778
    %vm780 = vweird.f32 %v760
    %vm781 = vweird.f32 %v775
    %vm782 = vmor %vm780, %vm781
    %v783 = vsel %vm782, %v775, %v779
    %v784 = vand.u32 2147483647, %v760
    %vm785 = vcmp.eq.f32.partialorder %v784, 8.507059e+37
    %v786 = vand.u32 %v760, 2147483648
    %v787 = vor.u32 1.1754944e-38, %v786
    %v788 = vsel %vm785, %v787, %v783
    %v789 = vmul.f32 %v752, %v774
    %v790 = vmul.f32 %v754, %v788
    %v792 = vsel %vm227, %v789, 0
    %v795 = vsel %vm227, %v790, 0
    %v798 = vsel %vm227, %v158, 0
    %800 = vmatpush.xpose.msra.mxu0 0.0
    %801 = vmatpush.xpose.msra.mxu0 0.0
    %802 = vmatpush.xpose.msra.mxu0 0.0
    %803 = vmatpush.xpose.msra.mxu0 0.0
    %804 = vmatpush.xpose.msra.mxu0 0.0
    %805 = vmatpush.xpose.msra.mxu0 0.0
    %806 = vmatpush.xpose.msra.mxu0 0.0
    %807 = vmatpush.xpose.msra.mxu0 0.0
    %808 = vmatpush.xpose.msra.mxu0 0.0
    %809 = vmatpush.xpose.msra.mxu0 0.0
    %810 = vmatpush.xpose.msra.mxu0 0.0
    %811 = vmatpush.xpose.msra.mxu0 0.0
    %812 = vmatpush.xpose.msra.mxu0 0.0
    %813 = vmatpush.xpose.msra.mxu0 0.0
    %814 = vmatpush.xpose.msra.mxu0 0.0
    %815 = vmatpush.xpose.msra.mxu0 %v798
    %816 = vmatmul.f32.gmra.mxu0 %v792
    %v817 = vpop.f32.mrf.mxu0
    %v818 = vadd.f32 0.0, %v817
    %819 = vmatmul.f32.gmra.mxu0 %v795
    %v820 = vpop.f32.mrf.mxu0
    %v821 = vadd.f32 0.0, %v820
    %822 = vdwg.mxu0
    %v824 = vsel %vm197, %v818, 0
    %v827 = vsel %vm197, %v821, 0
    %829 = vmatpush.msra.mxu0 0.0
    %830 = vmatpush.msra.mxu0 0.0
    %831 = vmatpush.msra.mxu0 0.0
    %832 = vmatpush.msra.mxu0 0.0
    %833 = vmatpush.msra.mxu0 0.0
    %834 = vmatpush.msra.mxu0 0.0
    %835 = vmatpush.msra.mxu0 0.0
    %836 = vmatpush.msra.mxu0 0.0
    %837 = vmatpush.msra.mxu0 0.0
    %838 = vmatpush.msra.mxu0 0.0
    %839 = vmatpush.msra.mxu0 0.0
    %840 = vmatpush.msra.mxu0 0.0
    %841 = vmatpush.msra.mxu0 0.0
    %842 = vmatpush.msra.mxu0 0.0
    %843 = vmatpush.msra.mxu0 0.0
    %844 = vmatpush.msra.mxu0 %v163
    %845 = vmatmul.f32.gmra.mxu0 %v824
    %v846 = vpop.f32.mrf.mxu0
    %v847 = vadd.f32 0.0, %v846
    %848 = vmatmul.f32.gmra.mxu0 %v827
    %v849 = vpop.f32.mrf.mxu0
    %v850 = vadd.f32 0.0, %v849
    %851 = vdwg.mxu0
    %v852 = vadd.f32 %v679, %v847
    %v853 = vadd.f32 %v680, %v850
    %v854 = vld [vmem:[%s6] sm:$0x1]
    %v856 = vperm.slane %v854, 0
    %v858 = vadd.f32 %v852, %v856
    %v859 = vadd.f32 %v853, %v856
    %860 = vst.msk [vmem:[#allocation2] sm:$0xff] %vm88, %v858
    %861 = vst.msk [vmem:[#allocation2 + $0x8] sm:$0xff] %vm88, %v859
    // Predicated region
    $region34: #{multihead_attention.1} parent=1 // pred_check
      _
    $region35: #{multihead_attention.1} parent=1 // pred_check_branch
      %863 = sbr.rel (0) target = $region37
    $region36: #{multihead_attention.1} parent=1 // pred_region
      %865 = vsyncadd [#allocation3], 0
      %s866 = sshll.u32 [#allocation2], 4
      %s867 = int_to_ptr.vmem [resolvable:$true] %s866
      %s868 = sshll.u32 %s8, 4
      %s869 = int_to_ptr.hbm [resolvable:$true] %s868
      %874 = dma.vmem_to_hbm [thread:$0]  %s867, 256, %s869, [#allocation3], 128, 128, 8
    $region37: #{multihead_attention.1} parent=1 // pred_fallthru
      _
    // Predicated region
    $region38: #{multihead_attention.1} parent=1 // pred_check
      _
    $region39: #{multihead_attention.1} parent=1 // pred_check_branch
      %876 = sbr.rel (0) target = $region41
    $region40: #{multihead_attention.1} parent=1 // pred_region
      %878 = dma.done [#allocation3], 256
    $region41: #{multihead_attention.1} parent=1 // pred_fallthru
      _
    %879 = vsyncpa [#allocation3], 1

</llo_original>
